<compile_context>
chip_gen: v7x
topology: tpu7x:2x2x1
jax: 0.10.0
libtpu: 0.0.40
codegen_flags: <defaults>
</compile_context>

<pallas_src>
import functools

import jax
import jax.numpy as jnp
from jax.experimental import pallas as pl
from jax.experimental.pallas import tpu as pltpu


# ------------------------------------ Kernel -----------------------------------------------
def seqsep_kernel(idx_j_ref, idx_i_ref, emb_ref, out_ref, *, minpos, nbin, fill_bin):
    # idx_j_ref: (1, L)        int32  column residue indices (lane-dense)
    # idx_i_ref: (TL, 1)       int32  row residue indices for this tile
    # emb_ref:   (NBIN_PAD, D)        embedding table (zero-padded along rows)
    # out_ref:   (1, TL, L, D)
    o = pl.program_id(0)                                    # oligo slab
    TL = idx_i_ref.shape[0]
    L = idx_j_ref.shape[1]
    nbin_pad, D = emb_ref.shape

    @pl.when(o == 0)
    def _compute():
        idx_i = idx_i_ref[...]                              # (TL, 1)
        idx_j = idx_j_ref[...]                              # (1, L)
        seqsep = idx_j - idx_i                              # (TL, L) = idx[j] - idx[i]

        # torch.bucketize(v, arange(minpos, maxpos)) == clip(v - minpos, 0, nbin-1)
        # (exact for integer-valued v, which is what the module produces)
        ib = jnp.clip(seqsep - minpos, 0, nbin - 1)         # (TL, L) in [0, nbin-1]

        # one-hot embedding gather via MXU matmul (lane-dense: D is the output minor dim)
        k_iota = jax.lax.broadcasted_iota(jnp.int32, (TL, L, nbin_pad), 2)
        onehot = (ib[:, :, None] == k_iota).astype(jnp.float32)      # (TL, L, NBIN_PAD)
        emb = emb_ref[...].astype(jnp.float32)                       # (NBIN_PAD, D)
        res = jnp.dot(onehot.reshape(TL * L, nbin_pad), emb,
                      preferred_element_type=jnp.float32)            # (TL*L, D)
        out_ref[0] = res.reshape(TL, L, D).astype(out_ref.dtype)

    @pl.when(o != 0)
    def _fill():
        # slabs o > 0 are the constant 100 everywhere -> a single embedding row, broadcast.
        row = emb_ref[pl.ds(fill_bin, 1), :]                # (1, D)
        out_ref[0] = jnp.broadcast_to(
            row.reshape(1, 1, D), (TL, L, D)).astype(out_ref.dtype)


# ------------------------------------ Wrapper -----------------------------------------------
def _pick_row_tile(L, D, target_bytes=4 << 20):
    """Largest row tile that divides L, is a multiple of 8 (or == L), and keeps the f32
    output block (TL, L, D) around <= target_bytes (double-buffering headroom)."""
    tl = L
    while tl % 2 == 0 and (tl // 2) % 8 == 0 and tl * L * D * 4 > target_bytes:
        tl //= 2
    return tl


@functools.partial(jax.jit, static_argnames=("minpos", "maxpos", "oligo", "row_tile"))
def seqsep_forward(idx, emb_weight, *, minpos=-32, maxpos=32, oligo=1, row_tile=None):
    B, L = idx.shape
    assert B == 1, "SeqSep semantics (seqsep[0] = idx[:,None,:] - idx[:,:,None]) require B == 1"
    nbin = abs(minpos) + maxpos + 1
    NBIN, D = emb_weight.shape
    assert NBIN == nbin, f"embedding table has {NBIN} rows, expected nbin={nbin}"

    idx = idx.astype(jnp.int32)
    idx_cols = idx                                 # (1, L)   -> broadcast over rows
    idx_rows = idx.reshape(L, 1)                   # (L, 1)   -> tiled over rows

    # pad the tiny table's contraction dim to a multiple of 128 for clean MXU alignment
    nbin_pad = ((nbin + 127) // 128) * 128
    emb_padded = jnp.pad(emb_weight, ((0, nbin_pad - nbin), (0, 0)))

    # bucket that the constant fill value (100) lands in — static
    fill_bin = min(max(100 - minpos, 0), nbin - 1)

    TL = row_tile if row_tile is not None else _pick_row_tile(L, D)
    assert L % TL == 0 and (TL % 8 == 0 or TL == L)

    kernel = functools.partial(seqsep_kernel, minpos=minpos, nbin=nbin, fill_bin=fill_bin)

    out = pl.pallas_call(
        kernel,
        out_shape=jax.ShapeDtypeStruct((oligo, L, L, D), emb_weight.dtype),
        grid=(oligo, L // TL),
        in_specs=[
            pl.BlockSpec((1, L), lambda o, ti: (0, 0)),         # column indices (full row)
            pl.BlockSpec((TL, 1), lambda o, ti: (ti, 0)),       # row indices (tile)
            pl.BlockSpec((nbin_pad, D), lambda o, ti: (0, 0)),  # embedding table (resident)
        ],
        out_specs=pl.BlockSpec((1, TL, L, D), lambda o, ti: (o, ti, 0, 0)),
        compiler_params=pltpu.CompilerParams(
            dimension_semantics=("parallel", "parallel")),
    )(idx_cols, idx_rows, emb_padded)
    return out


# -------------------------------- Pure-JAX reference ----------------------------------------
def seqsep_reference(idx, emb_weight, *, minpos=-32, maxpos=32, oligo=1):
    B, L = idx.shape
    bins = jnp.arange(minpos, maxpos)                                    # nbin-1 boundaries
    seqsep = jnp.full((oligo, L, L), 100, dtype=idx.dtype)
    seqsep = seqsep.at[0].set((idx[:, None, :] - idx[:, :, None])[0])
    ib = jnp.searchsorted(bins, seqsep, side="left")                     # == torch.bucketize
    return emb_weight[ib]                                                # (oligo, L, L, D)


if __name__ == "__main__":
    # Small shapes consistent with the module's forward.
    B, L, D_MODEL = 1, 16, 128
    MINPOS, MAXPOS = -32, 32
    NBIN = abs(MINPOS) + MAXPOS + 1                # 65
    OLIGO = 2                                      # exercises the constant-100 slab path

    key = jax.random.PRNGKey(0)
    k_idx, k_emb = jax.random.split(key)

    # residue indices with gaps so |idx[j]-idx[i]| lands both inside and outside [-32, 32]
    idx = jnp.cumsum(jax.random.randint(k_idx, (B, L), 1, 8, dtype=jnp.int32), axis=1)
    emb_weight = jax.random.normal(k_emb, (NBIN, D_MODEL), dtype=jnp.float32)

    out = seqsep_forward(idx, emb_weight, minpos=MINPOS, maxpos=MAXPOS, oligo=OLIGO)
    out = jax.block_until_ready(out)

    ref = seqsep_reference(idx, emb_weight, minpos=MINPOS, maxpos=MAXPOS, oligo=OLIGO)
    assert out.shape == (OLIGO, L, L, D_MODEL)
    assert jnp.allclose(out, ref, atol=1e-5, rtol=1e-5), \
        f"mismatch: max abs err {jnp.max(jnp.abs(out - ref))}"

    print("KERNEL_OK")
</pallas_src>

<mosaic_0001>
module attributes {stable_mosaic.version = 11 : i64} {
  func.func @seqsep_kernel(%arg0: i32, %arg1: i32, %arg2: memref<1x16xi32, #tpu.memory_space<vmem>>, %arg3: memref<16x1xi32, #tpu.memory_space<vmem>>, %arg4: memref<128x128xf32, #tpu.memory_space<vmem>>, %arg5: memref<1x16x16x128xf32, #tpu.memory_space<vmem>>) attributes {dimension_semantics = [#tpu.dimension_semantics<parallel>, #tpu.dimension_semantics<parallel>], iteration_bounds = array<i64: 2, 1>, scalar_prefetch = 0 : i64, scratch_operands = 0 : i64, tpu.core_type = #tpu.core_type<tc>, window_params = [{pipeline_mode = #tpu.pipeline_mode<synchronous>, transform_indices = @transform_0, window_bounds = array<i64: 1, 16>}, {transform_indices = @transform_1, window_bounds = array<i64: 16, 1>}, {pipeline_mode = #tpu.pipeline_mode<synchronous>, transform_indices = @transform_2, window_bounds = array<i64: 128, 128>}, {transform_indices = @transform_3, window_bounds = array<i64: 1, 16, 16, 128>}]} {
    %c0_i32 = arith.constant 0 : i32
    %0 = arith.cmpi eq, %arg0, %c0_i32 : i32
    %1 = arith.extui %0 : i1 to i32
    %c0_i32_0 = arith.constant 0 : i32
    %2 = arith.cmpi ne, %1, %c0_i32_0 : i32
    scf.if %2 {
      %c0 = arith.constant 0 : index
      %c0_3 = arith.constant 0 : index
      %6 = vector.load %arg3[%c0, %c0_3] : memref<16x1xi32, #tpu.memory_space<vmem>>, vector<16x1xi32>
      %c0_4 = arith.constant 0 : index
      %c0_5 = arith.constant 0 : index
      %7 = vector.load %arg2[%c0_4, %c0_5] : memref<1x16xi32, #tpu.memory_space<vmem>>, vector<1x16xi32>
      %8 = vector.broadcast %7 : vector<1x16xi32> to vector<16x16xi32>
      %9 = vector.broadcast %6 : vector<16x1xi32> to vector<16x16xi32>
      %10 = arith.subi %8, %9 : vector<16x16xi32>
      %c-32_i32 = arith.constant -32 : i32
      %11 = vector.broadcast %c-32_i32 : i32 to vector<16x16xi32>
      %12 = arith.subi %10, %11 : vector<16x16xi32>
      %c0_i32_6 = arith.constant 0 : i32
      %c64_i32 = arith.constant 64 : i32
      %13 = vector.broadcast %c0_i32_6 : i32 to vector<16x16xi32>
      %14 = arith.maxsi %13, %12 : vector<16x16xi32>
      %15 = vector.broadcast %c64_i32 : i32 to vector<16x16xi32>
      %16 = arith.minsi %15, %14 : vector<16x16xi32>
      %17 = tpu.iota {dimensions = array<i32: 2>} : vector<16x16x128xi32>
      %18 = vector.shape_cast %16 : vector<16x16xi32> to vector<16x16x1xi32>
      %19 = vector.broadcast %18 : vector<16x16x1xi32> to vector<16x16x128xi32>
      %20 = arith.cmpi eq, %19, %17 : vector<16x16x128xi32>
      %21 = arith.extui %20 : vector<16x16x128xi1> to vector<16x16x128xi32>
      %22 = arith.sitofp %21 : vector<16x16x128xi32> to vector<16x16x128xf32>
      %c0_7 = arith.constant 0 : index
      %c0_8 = arith.constant 0 : index
      %23 = vector.load %arg4[%c0_7, %c0_8] : memref<128x128xf32, #tpu.memory_space<vmem>>, vector<128x128xf32>
      %24 = vector.shape_cast %22 : vector<16x16x128xf32> to vector<256x128xf32>
      %cst = arith.constant dense<0.000000e+00> : vector<256x128xf32>
      %25 = tpu.matmul %24, %23, %cst {dimension_numbers = #tpu.dot_dimension_numbers<[1], [0], [0], [1], [0, 0, 1, 1], [], []>} : vector<256x128xf32>, vector<128x128xf32>, vector<256x128xf32> -> vector<256x128xf32>
      %26 = vector.shape_cast %25 : vector<256x128xf32> to vector<16x16x128xf32>
      %c0_9 = arith.constant 0 : index
      %c0_10 = arith.constant 0 : index
      %c0_11 = arith.constant 0 : index
      %c0_12 = arith.constant 0 : index
      %27 = vector.load %arg5[%c0_9, %c0_10, %c0_11, %c0_12] : memref<1x16x16x128xf32, #tpu.memory_space<vmem>>, vector<1x16x16x128xf32>
      %28 = vector.shape_cast %27 : vector<1x16x16x128xf32> to vector<16x16x128xf32>
      %29 = vector.shape_cast %26 : vector<16x16x128xf32> to vector<1x16x16x128xf32>
      tpu.vector_store %arg5[%c0_9, %c0_10, %c0_11, %c0_12], %29 {strides = array<i32>} : memref<1x16x16x128xf32, #tpu.memory_space<vmem>>, vector<1x16x16x128xf32>,
    } else {
    }
    %c0_i32_1 = arith.constant 0 : i32
    %3 = arith.cmpi ne, %arg0, %c0_i32_1 : i32
    %4 = arith.extui %3 : i1 to i32
    %c0_i32_2 = arith.constant 0 : i32
    %5 = arith.cmpi ne, %4, %c0_i32_2 : i32
    scf.if %5 {
      %c64 = arith.constant 64 : index
      %c0 = arith.constant 0 : index
      %6 = vector.load %arg4[%c64, %c0] : memref<128x128xf32, #tpu.memory_space<vmem>>, vector<1x128xf32>
      %7 = vector.shape_cast %6 : vector<1x128xf32> to vector<1x1x128xf32>
      %8 = vector.shape_cast %7 : vector<1x1x128xf32> to vector<1x1x128xf32>
      %9 = vector.broadcast %8 : vector<1x1x128xf32> to vector<16x16x128xf32>
      %c0_3 = arith.constant 0 : index
      %c0_4 = arith.constant 0 : index
      %c0_5 = arith.constant 0 : index
      %c0_6 = arith.constant 0 : index
      %10 = vector.load %arg5[%c0_3, %c0_4, %c0_5, %c0_6] : memref<1x16x16x128xf32, #tpu.memory_space<vmem>>, vector<1x16x16x128xf32>
      %11 = vector.shape_cast %10 : vector<1x16x16x128xf32> to vector<16x16x128xf32>
      %12 = vector.shape_cast %9 : vector<16x16x128xf32> to vector<1x16x16x128xf32>
      tpu.vector_store %arg5[%c0_3, %c0_4, %c0_5, %c0_6], %12 {strides = array<i32>} : memref<1x16x16x128xf32, #tpu.memory_space<vmem>>, vector<1x16x16x128xf32>,
    } else {
    }
    return
  }
  func.func @transform_0(%arg0: i32, %arg1: i32) -> (i32, i32) {
    %c0_i32 = arith.constant 0 : i32
    %c0_i32_0 = arith.constant 0 : i32
    %c0_i32_1 = arith.constant 0 : i32
    return %c0_i32, %c0_i32_0 : i32, i32
  }
  func.func @transform_1(%arg0: i32, %arg1: i32) -> (i32, i32) {
    %c0_i32 = arith.constant 0 : i32
    %c0_i32_0 = arith.constant 0 : i32
    return %arg1, %c0_i32 : i32, i32
  }
  func.func @transform_2(%arg0: i32, %arg1: i32) -> (i32, i32) {
    %c0_i32 = arith.constant 0 : i32
    %c0_i32_0 = arith.constant 0 : i32
    %c0_i32_1 = arith.constant 0 : i32
    return %c0_i32, %c0_i32_0 : i32, i32
  }
  func.func @transform_3(%arg0: i32, %arg1: i32) -> (i32, i32, i32, i32) {
    %c0_i32 = arith.constant 0 : i32
    %c0_i32_0 = arith.constant 0 : i32
    %c0_i32_1 = arith.constant 0 : i32
    return %arg0, %arg1, %c0_i32, %c0_i32_0 : i32, i32, i32, i32
  }
}

</mosaic_0001>

<llo_original>
// kernel: seqsep_forward.1
$region0: #{seqsep_forward.1}
  #allocation0 [shape = 'u32[]', space=smem, size = 0x4, offset = 0x4, fixed_abs, tag = 'smem constant byte address 0x4 - core index']
  #allocation1 [shape = 'u32[144,128]{1,0:T(1,128)}', space=vmem, size = 0x12000, scoped, tag = 'internal scratch']
  %s0 = inlined_call_operand.vmem [shape: s32[1,16], index: 0, kind: input, shape index: {}]
  %s1 = inlined_call_operand.vmem [shape: s32[16,1], index: 1, kind: input, shape index: {}]
  %s2 = inlined_call_operand.vmem [shape: f32[128,128], index: 2, kind: input, shape index: {}]
  %s3 = inlined_call_operand.hbm [shape: f32[2,16,16,128], index: 3, kind: output, shape index: {}]
  %s4 = sld [smem:[#allocation0]]
  $region53: #{seqsep_forward.1} parent=0
    _
  %s6 = ssub.s32 1, %s4
  %s7 = scalar_select 0, %s6, %s4
  $region1: #{seqsep_forward.1} parent=0
    #allocation2 [shape = 'u8[262144]{0}', space=vmem, size = 0x40000, scoped, tag = 'output window, operand 0']
    #allocation3 [shape = 's32[2]{0}', space=sflag, size = 0x8, scoped, tag = 'scoped memory for seqsep_forward.1']
    %8 = vsyncpa [#allocation3], 0
    %s9 = scalar_lea.sflag [#allocation3], 1
    %10 = vsyncpa %s9, 0
    loop: start=0, step=1, limit=4
    $region2: #{seqsep_forward.1} parent=1 // loop_pre_header
      _
    $region3: #{seqsep_forward.1} parent=1 // loop_header
      %s12 = sphi 0, %s16
      %p13 = scmp.ge.s32.totalorder %s12, 4
      %s19 = sphi 0, %s31
      %s20 = sphi 0, %s27
      %s21 = sphi 0, %s19
      %s22 = sphi 0, %s20
      %s23 = sphi 0, %s21
      %s24 = sphi 0, %s22
      %s32 = sphi 0, %s32
      %s34 = sphi 0, %s32
      %s35 = sphi 0, %s34
      %s49 = sphi 0, %s35
      %s55 = sphi 0, %s57
      %s58 = sphi 0, %s55
      %s59 = sphi 0, %s58
      %s75 = sphi 0, %s59
      %s79 = sphi 0, %s79
      %s81 = sphi 0, %s79
      %s82 = sphi 0, %s81
      %s96 = sphi 0, %s82
      %s104 = sphi 0, %s106
      %s107 = sphi 0, %s104
      %s108 = sphi 0, %s107
      %s124 = sphi 0, %s108
    $region4: #{seqsep_forward.1} parent=1 // loop_header_branch
      %15 = sbr.rel (%p13) target = $region8
    $region5: #{seqsep_forward.1} parent=1 // loop_body
      %s17 = ssub.s32 %s12, 1
      %s18 = ssub.s32 %s12, 2
      %s25 = sadd.s32 1, %s20
      %p26 = scmp.ge.s32.totalorder %s25, 1
      %s27 = scalar_select %p26, 0, %s25
      %s28 = sadd.s32 1, %s19
      %s29 = scalar_select %p26, %s28, %s19
      %p30 = scmp.ge.s32.totalorder %s29, 2
      %s31 = scalar_select %p30, 0, %s29
      %s33 = sadd.s32 %s32, 1
      %p36 = scmp.eq.s32.totalorder %s12, 1
      %p37 = scmp.ne.s32.totalorder %s32, %s34
      %p38 = scmp.eq.s32.totalorder %s12, 0
      %p39 = por %p37, %p38
      %p40 = scmp.ne.s32.totalorder %s32, %s34
      %p41 = scmp.eq.s32.totalorder %s17, 1
      %p42 = por %p40, %p41
      %p43 = scmp.ne.s32.totalorder %s34, %s35
      %p44 = scmp.eq.s32.totalorder %s17, 0
      %p45 = por %p43, %p44
      %p46 = scmp.ne.s32.totalorder %s34, %s35
      %p47 = scmp.eq.s32.totalorder %s18, 1
      %p48 = por %p46, %p47
      %p50 = scmp.ne.s32.totalorder %s35, %s49
      %p51 = scmp.eq.s32.totalorder %s18, 0
      %p52 = por %p50, %p51
      %s53 = ssub.s32 %s20, %s27
      %p54 = scmp.eq.s32.totalorder %s53, 0
      %s56 = sadd.s32 %s55, 1
      %s57 = scalar_select %p54, %s55, %s56
      %p60 = pneg %p54
      %p61 = scmp.eq.s32.totalorder %s12, 1
      %p62 = por %p60, %p61
      %p63 = scmp.ne.s32.totalorder %s55, %s58
      %p64 = scmp.eq.s32.totalorder %s12, 0
      %p65 = por %p63, %p64
      %p66 = scmp.ne.s32.totalorder %s55, %s58
      %p67 = scmp.eq.s32.totalorder %s17, 1
      %p68 = por %p66, %p67
      %p69 = scmp.ne.s32.totalorder %s58, %s59
      %p70 = scmp.eq.s32.totalorder %s17, 0
      %p71 = por %p69, %p70
      %p72 = scmp.ne.s32.totalorder %s58, %s59
      %p73 = scmp.eq.s32.totalorder %s18, 1
      %p74 = por %p72, %p73
      %p76 = scmp.ne.s32.totalorder %s59, %s75
      %p77 = scmp.eq.s32.totalorder %s18, 0
      %p78 = por %p76, %p77
      %s80 = sadd.s32 %s79, 1
      %p83 = scmp.eq.s32.totalorder %s12, 1
      %p84 = scmp.ne.s32.totalorder %s79, %s81
      %p85 = scmp.eq.s32.totalorder %s12, 0
      %p86 = por %p84, %p85
      %p87 = scmp.ne.s32.totalorder %s79, %s81
      %p88 = scmp.eq.s32.totalorder %s17, 1
      %p89 = por %p87, %p88
      %p90 = scmp.ne.s32.totalorder %s81, %s82
      %p91 = scmp.eq.s32.totalorder %s17, 0
      %p92 = por %p90, %p91
      %p93 = scmp.ne.s32.totalorder %s81, %s82
      %p94 = scmp.eq.s32.totalorder %s18, 1
      %p95 = por %p93, %p94
      %p97 = scmp.ne.s32.totalorder %s82, %s96
      %p98 = scmp.eq.s32.totalorder %s18, 0
      %p99 = por %p97, %p98
      %s100 = ssub.s32 %s19, %s31
      %s101 = ssub.s32 %s20, %s27
      %s102 = sor.u32 %s100, %s101
      %p103 = scmp.eq.s32.totalorder %s102, 0
      %s105 = sadd.s32 %s104, 1
      %s106 = scalar_select %p103, %s104, %s105
      %p109 = pneg %p103
      %p110 = scmp.eq.s32.totalorder %s12, 1
      %p111 = por %p109, %p110
      %p112 = scmp.ne.s32.totalorder %s104, %s107
      %p113 = scmp.eq.s32.totalorder %s12, 0
      %p114 = por %p112, %p113
      %p115 = scmp.ne.s32.totalorder %s104, %s107
      %p116 = scmp.eq.s32.totalorder %s17, 1
      %p117 = por %p115, %p116
      %p118 = scmp.ne.s32.totalorder %s107, %s108
      %p119 = scmp.eq.s32.totalorder %s17, 0
      %p120 = por %p118, %p119
      %p121 = scmp.ne.s32.totalorder %s107, %s108
      %p122 = scmp.eq.s32.totalorder %s18, 1
      %p123 = por %p121, %p122
      %p125 = scmp.ne.s32.totalorder %s108, %s124
      %p126 = scmp.eq.s32.totalorder %s18, 0
      %p127 = por %p125, %p126
      %p128 = scmp.le.s32.totalorder 1, %s12
      %p129 = scmp.lt.s32.totalorder %s12, 3
      %p130 = pnand %p128, %p129
      %p131 = pneg %p130
      // Predicated region
      $region9: #{seqsep_forward.1} parent=5 // pred_check
        _
      $region10: #{seqsep_forward.1} parent=5 // pred_check_branch
        %133 = sbr.rel (%p130) target = $region12
      $region11: #{seqsep_forward.1} parent=5 // pred_region
        %s134 = ssub.s32 %s12, 1
        // Predicated region
        $region13: #{seqsep_forward.1} parent=11 // pred_check
          %p135 = pneg %p45
        $region14: #{seqsep_forward.1} parent=11 // pred_check_branch
          %137 = sbr.rel (%p135) target = $region16
        $region15: #{seqsep_forward.1} parent=11 // pred_region
          _
        $region16: #{seqsep_forward.1} parent=11 // pred_fallthru
          _
        // Predicated region
        $region17: #{seqsep_forward.1} parent=11 // pred_check
          %p138 = pneg %p71
        $region18: #{seqsep_forward.1} parent=11 // pred_check_branch
          %140 = sbr.rel (%p138) target = $region20
        $region19: #{seqsep_forward.1} parent=11 // pred_region
          %s141 = smul.u32 2, %s22
          %p142 = scmp.lt.s32.totalorder %s141, 1
          %s143 = scalar_select %p142, %s141, 1
          %s144 = smul.addr %s143, 8
          %s145 = scalar_lea.vmem %s1, %s144
          %s146 = smul.u32 2, %s22
        $region20: #{seqsep_forward.1} parent=11 // pred_fallthru
          _
        // Predicated region
        $region21: #{seqsep_forward.1} parent=11 // pred_check
          %p147 = pneg %p92
        $region22: #{seqsep_forward.1} parent=11 // pred_check_branch
          %149 = sbr.rel (%p147) target = $region24
        $region23: #{seqsep_forward.1} parent=11 // pred_region
          _
        $region24: #{seqsep_forward.1} parent=11 // pred_fallthru
          _
      $region12: #{seqsep_forward.1} parent=5 // pred_fallthru
        _
      %p150 = scmp.lt.s32.totalorder %s12, 2
      // Predicated region
      $region25: #{seqsep_forward.1} parent=5 // pred_check
        %p151 = pneg %p150
      $region26: #{seqsep_forward.1} parent=5 // pred_check_branch
        %153 = sbr.rel (%p151) target = $region28
      $region27: #{seqsep_forward.1} parent=5 // pred_region
        _
      $region28: #{seqsep_forward.1} parent=5 // pred_fallthru
        _
      %p154 = scmp.le.s32.totalorder 1, %s12
      %p155 = scmp.lt.s32.totalorder %s12, 3
      %p156 = pnand %p154, %p155
      %p157 = pneg %p156
      // Predicated region
      $region29: #{seqsep_forward.1} parent=5 // pred_check
        _
      $region30: #{seqsep_forward.1} parent=5 // pred_check_branch
        %159 = sbr.rel (%p156) target = $region32
      $region31: #{seqsep_forward.1} parent=5 // pred_region
        %s160 = ssub.s32 %s12, 1
        %p161 = pneg %p45
        %p162 = pneg %p42
        %s163 = smul.u32 2, %s22
        %p164 = scmp.lt.s32.totalorder %s163, 1
        %s165 = scalar_select %p164, %s163, 1
        %s166 = smul.addr %s165, 8
        %s167 = scalar_lea.vmem %s1, %s166
        %p168 = pneg %p71
        %p169 = pneg %p68
        %p170 = pneg %p92
        %p171 = pneg %p89
        %p172 = pneg %p120
        %p173 = pneg %p117
        %s174 = sand.u32 %s107, 1
        %s175 = scalar_lea.sflag [#allocation3], %s174
        %s176 = sand.u32 %s107, 1
        %s177 = smul.addr %s176, 256
        %s178 = scalar_lea.vmem [#allocation2], %s177
        %s179 = smul.u32 2, %s22
        %p180 = scmp.lt.s32.totalorder %s179, 1
        %s181 = scalar_select %p180, %s179, 1
        %s182 = smul.addr %s181, 8
        %s183 = scalar_lea.vmem %s1, %s182
        %s184 = smul.u32 2, %s22
        %s185 = smul.u32 16, %s22
        %p186 = scmp.eq.s32.totalorder %s21, 0
        // Predicated region
        $region33: #{seqsep_forward.1} parent=31 // pred_check
          %p187 = pneg %p186
        $region34: #{seqsep_forward.1} parent=31 // pred_check_branch
          %189 = sbr.rel (%p187) target = $region36
        $region35: #{seqsep_forward.1} parent=31 // pred_region
          %v190 = vld [vmem:[%s183] sm:$0xff]
          %v191 = vld [vmem:[%s183 + $0x8] sm:$0xff]
          %v192 = vld [vmem:[%s0] sm:$0x1]
          %v193 = vlaneseq
          %v194 = vshrl.u32 %v193, 7
          %v195 = vsub.s32 0, %v194
          %v196 = vrot.slane %v192, %v195
          %197 = vset.pattern.permute.xlu0 0
          %198 = vperm.xlu0 %197, %v190
          %v199 = vpop.permute.xlu0 %198
          %200 = vset.pattern.permute.xlu0 0
          %201 = vperm.xlu0 %200, %v191
          %v202 = vpop.permute.xlu0 %201
          %v203 = vsub.s32 %v196, %v199
          %v204 = vsub.s32 %v196, %v202
          %v205 = vsub.s32 %v203, 4294967264
          %v206 = vsub.s32 %v204, 4294967264
          %vm207 = vcmp.gt.s32.totalorder %v205, 0
          %v208 = vsel %vm207, %v205, 0
          %vm209 = vcmp.gt.s32.totalorder %v206, 0
          %v210 = vsel %vm209, %v206, 0
          %vm211 = vcmp.lt.s32.totalorder %v208, 64
          %v212 = vsel %vm211, %v208, 64
          %vm213 = vcmp.lt.s32.totalorder %v210, 64
          %v214 = vsel %vm213, %v210, 64
          %v215 = vlaneseq
          %v216 = vand.u32 %v215, 127
          %v217 = vlaneseq
          %v218 = vshrl.u32 %v217, 7
          %v219 = vsub.s32 0, %v218
          %v220 = vrot.slane %v212, %v219
          %222 = vbcast.lane.b32.xlu0 %v220, 256
          %v223 = vpop.permute.xlu0 %222
          %s225 = sor.u32 256, 8
          %226 = vbcast.lane.b32.xlu0 %v220, %s225
          %v227 = vpop.permute.xlu0 %226
          %v228 = vlaneseq
          %v229 = vshrl.u32 %v228, 7
          %v230 = vsub.s32 1, %v229
          %v231 = vrot.slane %v212, %v230
          %233 = vbcast.lane.b32.xlu0 %v231, 256
          %v234 = vpop.permute.xlu0 %233
          %s236 = sor.u32 256, 8
          %237 = vbcast.lane.b32.xlu0 %v231, %s236
          %v238 = vpop.permute.xlu0 %237
          %v239 = vlaneseq
          %v240 = vshrl.u32 %v239, 7
          %v241 = vsub.s32 2, %v240
          %v242 = vrot.slane %v212, %v241
          %244 = vbcast.lane.b32.xlu0 %v242, 256
          %v245 = vpop.permute.xlu0 %244
          %s247 = sor.u32 256, 8
          %248 = vbcast.lane.b32.xlu0 %v242, %s247
          %v249 = vpop.permute.xlu0 %248
          %v250 = vlaneseq
          %v251 = vshrl.u32 %v250, 7
          %v252 = vsub.s32 3, %v251
          %v253 = vrot.slane %v212, %v252
          %255 = vbcast.lane.b32.xlu0 %v253, 256
          %v256 = vpop.permute.xlu0 %255
          %s258 = sor.u32 256, 8
          %259 = vbcast.lane.b32.xlu0 %v253, %s258
          %v260 = vpop.permute.xlu0 %259
          %v261 = vlaneseq
          %v262 = vshrl.u32 %v261, 7
          %v263 = vsub.s32 4, %v262
          %v264 = vrot.slane %v212, %v263
          %266 = vbcast.lane.b32.xlu0 %v264, 256
          %v267 = vpop.permute.xlu0 %266
          %s269 = sor.u32 256, 8
          %270 = vbcast.lane.b32.xlu0 %v264, %s269
          %v271 = vpop.permute.xlu0 %270
          %v272 = vlaneseq
          %v273 = vshrl.u32 %v272, 7
          %v274 = vsub.s32 5, %v273
          %v275 = vrot.slane %v212, %v274
          %277 = vbcast.lane.b32.xlu0 %v275, 256
          %v278 = vpop.permute.xlu0 %277
          %s280 = sor.u32 256, 8
          %281 = vbcast.lane.b32.xlu0 %v275, %s280
          %v282 = vpop.permute.xlu0 %281
          %v283 = vlaneseq
          %v284 = vshrl.u32 %v283, 7
          %v285 = vsub.s32 6, %v284
          %v286 = vrot.slane %v212, %v285
          %288 = vbcast.lane.b32.xlu0 %v286, 256
          %v289 = vpop.permute.xlu0 %288
          %s291 = sor.u32 256, 8
          %292 = vbcast.lane.b32.xlu0 %v286, %s291
          %v293 = vpop.permute.xlu0 %292
          %v294 = vlaneseq
          %v295 = vshrl.u32 %v294, 7
          %v296 = vsub.s32 7, %v295
          %v297 = vrot.slane %v212, %v296
          %299 = vbcast.lane.b32.xlu0 %v297, 256
          %v300 = vpop.permute.xlu0 %299
          %s302 = sor.u32 256, 8
          %303 = vbcast.lane.b32.xlu0 %v297, %s302
          %v304 = vpop.permute.xlu0 %303
          %v305 = vlaneseq
          %v306 = vshrl.u32 %v305, 7
          %v307 = vsub.s32 0, %v306
          %v308 = vrot.slane %v214, %v307
          %310 = vbcast.lane.b32.xlu0 %v308, 256
          %v311 = vpop.permute.xlu0 %310
          %s313 = sor.u32 256, 8
          %314 = vbcast.lane.b32.xlu0 %v308, %s313
          %v315 = vpop.permute.xlu0 %314
          %v316 = vlaneseq
          %v317 = vshrl.u32 %v316, 7
          %v318 = vsub.s32 1, %v317
          %v319 = vrot.slane %v214, %v318
          %321 = vbcast.lane.b32.xlu0 %v319, 256
          %v322 = vpop.permute.xlu0 %321
          %s324 = sor.u32 256, 8
          %325 = vbcast.lane.b32.xlu0 %v319, %s324
          %v326 = vpop.permute.xlu0 %325
          %v327 = vlaneseq
          %v328 = vshrl.u32 %v327, 7
          %v329 = vsub.s32 2, %v328
          %v330 = vrot.slane %v214, %v329
          %332 = vbcast.lane.b32.xlu0 %v330, 256
          %v333 = vpop.permute.xlu0 %332
          %s335 = sor.u32 256, 8
          %336 = vbcast.lane.b32.xlu0 %v330, %s335
          %v337 = vpop.permute.xlu0 %336
          %v338 = vlaneseq
          %v339 = vshrl.u32 %v338, 7
          %v340 = vsub.s32 3, %v339
          %v341 = vrot.slane %v214, %v340
          %343 = vbcast.lane.b32.xlu0 %v341, 256
          %v344 = vpop.permute.xlu0 %343
          %s346 = sor.u32 256, 8
          %347 = vbcast.lane.b32.xlu0 %v341, %s346
          %v348 = vpop.permute.xlu0 %347
          %v349 = vlaneseq
          %v350 = vshrl.u32 %v349, 7
          %v351 = vsub.s32 4, %v350
          %v352 = vrot.slane %v214, %v351
          %354 = vbcast.lane.b32.xlu0 %v352, 256
          %v355 = vpop.permute.xlu0 %354
          %s357 = sor.u32 256, 8
          %358 = vbcast.lane.b32.xlu0 %v352, %s357
          %v359 = vpop.permute.xlu0 %358
          %v360 = vlaneseq
          %v361 = vshrl.u32 %v360, 7
          %v362 = vsub.s32 5, %v361
          %v363 = vrot.slane %v214, %v362
          %365 = vbcast.lane.b32.xlu0 %v363, 256
          %v366 = vpop.permute.xlu0 %365
          %s368 = sor.u32 256, 8
          %369 = vbcast.lane.b32.xlu0 %v363, %s368
          %v370 = vpop.permute.xlu0 %369
          %v371 = vlaneseq
          %v372 = vshrl.u32 %v371, 7
          %v373 = vsub.s32 6, %v372
          %v374 = vrot.slane %v214, %v373
          %376 = vbcast.lane.b32.xlu0 %v374, 256
          %v377 = vpop.permute.xlu0 %376
          %s379 = sor.u32 256, 8
          %380 = vbcast.lane.b32.xlu0 %v374, %s379
          %v381 = vpop.permute.xlu0 %380
          %v382 = vlaneseq
          %v383 = vshrl.u32 %v382, 7
          %v384 = vsub.s32 7, %v383
          %v385 = vrot.slane %v214, %v384
          %387 = vbcast.lane.b32.xlu0 %v385, 256
          %v388 = vpop.permute.xlu0 %387
          %s390 = sor.u32 256, 8
          %391 = vbcast.lane.b32.xlu0 %v385, %s390
          %v392 = vpop.permute.xlu0 %391
          %vm393 = vcmp.eq.s32.totalorder %v223, %v216
          %vm394 = vcmp.eq.s32.totalorder %v227, %v216
          %vm395 = vcmp.eq.s32.totalorder %v234, %v216
          %vm396 = vcmp.eq.s32.totalorder %v238, %v216
          %vm397 = vcmp.eq.s32.totalorder %v245, %v216
          %vm398 = vcmp.eq.s32.totalorder %v249, %v216
          %vm399 = vcmp.eq.s32.totalorder %v256, %v216
          %vm400 = vcmp.eq.s32.totalorder %v260, %v216
          %vm401 = vcmp.eq.s32.totalorder %v267, %v216
          %vm402 = vcmp.eq.s32.totalorder %v271, %v216
          %vm403 = vcmp.eq.s32.totalorder %v278, %v216
          %vm404 = vcmp.eq.s32.totalorder %v282, %v216
          %vm405 = vcmp.eq.s32.totalorder %v289, %v216
          %vm406 = vcmp.eq.s32.totalorder %v293, %v216
          %vm407 = vcmp.eq.s32.totalorder %v300, %v216
          %vm408 = vcmp.eq.s32.totalorder %v304, %v216
          %vm409 = vcmp.eq.s32.totalorder %v311, %v216
          %vm410 = vcmp.eq.s32.totalorder %v315, %v216
          %vm411 = vcmp.eq.s32.totalorder %v322, %v216
          %vm412 = vcmp.eq.s32.totalorder %v326, %v216
          %vm413 = vcmp.eq.s32.totalorder %v333, %v216
          %vm414 = vcmp.eq.s32.totalorder %v337, %v216
          %vm415 = vcmp.eq.s32.totalorder %v344, %v216
          %vm416 = vcmp.eq.s32.totalorder %v348, %v216
          %vm417 = vcmp.eq.s32.totalorder %v355, %v216
          %vm418 = vcmp.eq.s32.totalorder %v359, %v216
          %vm419 = vcmp.eq.s32.totalorder %v366, %v216
          %vm420 = vcmp.eq.s32.totalorder %v370, %v216
          %vm421 = vcmp.eq.s32.totalorder %v377, %v216
          %vm422 = vcmp.eq.s32.totalorder %v381, %v216
          %vm423 = vcmp.eq.s32.totalorder %v388, %v216
          %vm424 = vcmp.eq.s32.totalorder %v392, %v216
          %v425 = vsel %vm393, 1, 0
          %v426 = vsel %vm394, 1, 0
          %v427 = vsel %vm395, 1, 0
          %v428 = vsel %vm396, 1, 0
          %v429 = vsel %vm397, 1, 0
          %v430 = vsel %vm398, 1, 0
          %v431 = vsel %vm399, 1, 0
          %v432 = vsel %vm400, 1, 0
          %v433 = vsel %vm401, 1, 0
          %v434 = vsel %vm402, 1, 0
          %v435 = vsel %vm403, 1, 0
          %v436 = vsel %vm404, 1, 0
          %v437 = vsel %vm405, 1, 0
          %v438 = vsel %vm406, 1, 0
          %v439 = vsel %vm407, 1, 0
          %v440 = vsel %vm408, 1, 0
          %v441 = vsel %vm409, 1, 0
          %v442 = vsel %vm410, 1, 0
          %v443 = vsel %vm411, 1, 0
          %v444 = vsel %vm412, 1, 0
          %v445 = vsel %vm413, 1, 0
          %v446 = vsel %vm414, 1, 0
          %v447 = vsel %vm415, 1, 0
          %v448 = vsel %vm416, 1, 0
          %v449 = vsel %vm417, 1, 0
          %v450 = vsel %vm418, 1, 0
          %v451 = vsel %vm419, 1, 0
          %v452 = vsel %vm420, 1, 0
          %v453 = vsel %vm421, 1, 0
          %v454 = vsel %vm422, 1, 0
          %v455 = vsel %vm423, 1, 0
          %v456 = vsel %vm424, 1, 0
          %v457 = vcvt.s32.f32 %v425
          %v458 = vcvt.s32.f32 %v426
          %v459 = vcvt.s32.f32 %v427
          %v460 = vcvt.s32.f32 %v428
          %v461 = vcvt.s32.f32 %v429
          %v462 = vcvt.s32.f32 %v430
          %v463 = vcvt.s32.f32 %v431
          %v464 = vcvt.s32.f32 %v432
          %v465 = vcvt.s32.f32 %v433
          %v466 = vcvt.s32.f32 %v434
          %v467 = vcvt.s32.f32 %v435
          %v468 = vcvt.s32.f32 %v436
          %v469 = vcvt.s32.f32 %v437
          %v470 = vcvt.s32.f32 %v438
          %v471 = vcvt.s32.f32 %v439
          %v472 = vcvt.s32.f32 %v440
          %v473 = vcvt.s32.f32 %v441
          %v474 = vcvt.s32.f32 %v442
          %v475 = vcvt.s32.f32 %v443
          %v476 = vcvt.s32.f32 %v444
          %v477 = vcvt.s32.f32 %v445
          %v478 = vcvt.s32.f32 %v446
          %v479 = vcvt.s32.f32 %v447
          %v480 = vcvt.s32.f32 %v448
          %v481 = vcvt.s32.f32 %v449
          %v482 = vcvt.s32.f32 %v450
          %v483 = vcvt.s32.f32 %v451
          %v484 = vcvt.s32.f32 %v452
          %v485 = vcvt.s32.f32 %v453
          %v486 = vcvt.s32.f32 %v454
          %v487 = vcvt.s32.f32 %v455
          %v488 = vcvt.s32.f32 %v456
          %v489 = vld [vmem:[%s2] sm:$0xff]
          %v490 = vld [vmem:[%s2 + $0x8] sm:$0xff]
          %v491 = vld [vmem:[%s2 + $0x10] sm:$0xff]
          %v492 = vld [vmem:[%s2 + $0x18] sm:$0xff]
          %v493 = vld [vmem:[%s2 + $0x20] sm:$0xff]
          %v494 = vld [vmem:[%s2 + $0x28] sm:$0xff]
          %v495 = vld [vmem:[%s2 + $0x30] sm:$0xff]
          %v496 = vld [vmem:[%s2 + $0x38] sm:$0xff]
          %v497 = vld [vmem:[%s2 + $0x40] sm:$0xff]
          %v498 = vld [vmem:[%s2 + $0x48] sm:$0xff]
          %v499 = vld [vmem:[%s2 + $0x50] sm:$0xff]
          %v500 = vld [vmem:[%s2 + $0x58] sm:$0xff]
          %v501 = vld [vmem:[%s2 + $0x60] sm:$0xff]
          %v502 = vld [vmem:[%s2 + $0x68] sm:$0xff]
          %v503 = vld [vmem:[%s2 + $0x70] sm:$0xff]
          %v504 = vld [vmem:[%s2 + $0x78] sm:$0xff]
          %505 = vmatprep.subr.mxu0 0.0
          %506 = vmatpush1.msra.mxu0 %v489
          %507 = vmatprep.subr.mxu0 0.0
          %508 = vmatpush1.msra.mxu0 %v490
          %509 = vmatprep.subr.mxu0 0.0
          %510 = vmatpush1.msra.mxu0 %v491
          %511 = vmatprep.subr.mxu0 0.0
          %512 = vmatpush1.msra.mxu0 %v492
          %513 = vmatprep.subr.mxu0 0.0
          %514 = vmatpush1.msra.mxu0 %v493
          %515 = vmatprep.subr.mxu0 0.0
          %516 = vmatpush1.msra.mxu0 %v494
          %517 = vmatprep.subr.mxu0 0.0
          %518 = vmatpush1.msra.mxu0 %v495
          %519 = vmatprep.subr.mxu0 0.0
          %520 = vmatpush1.msra.mxu0 %v496
          %521 = vmatprep.subr.mxu0 0.0
          %522 = vmatpush1.msra.mxu0 %v497
          %523 = vmatprep.subr.mxu0 0.0
          %524 = vmatpush1.msra.mxu0 %v498
          %525 = vmatprep.subr.mxu0 0.0
          %526 = vmatpush1.msra.mxu0 %v499
          %527 = vmatprep.subr.mxu0 0.0
          %528 = vmatpush1.msra.mxu0 %v500
          %529 = vmatprep.subr.mxu0 0.0
          %530 = vmatpush1.msra.mxu0 %v501
          %531 = vmatprep.subr.mxu0 0.0
          %532 = vmatpush1.msra.mxu0 %v502
          %533 = vmatprep.subr.mxu0 0.0
          %534 = vmatpush1.msra.mxu0 %v503
          %535 = vmatprep.subr.mxu0 0.0
          %536 = vmatpush1.msra.mxu0 %v504
          %537 = vmatprep.subr.mxu0 0.0
          %538 = vmatpush1.msra.mxu0 0.0
          %539 = vmatprep.subr.mxu0 0.0
          %540 = vmatpush1.msra.mxu0 0.0
          %541 = vmatprep.subr.mxu0 0.0
          %542 = vmatpush1.msra.mxu0 0.0
          %543 = vmatprep.subr.mxu0 0.0
          %544 = vmatpush1.msra.mxu0 0.0
          %545 = vmatprep.subr.mxu0 0.0
          %546 = vmatpush1.msra.mxu0 0.0
          %547 = vmatprep.subr.mxu0 0.0
          %548 = vmatpush1.msra.mxu0 0.0
          %549 = vmatprep.subr.mxu0 0.0
          %550 = vmatpush1.msra.mxu0 0.0
          %551 = vmatprep.subr.mxu0 0.0
          %552 = vmatpush1.msra.mxu0 0.0
          %553 = vmatprep.subr.mxu0 0.0
          %554 = vmatpush1.msra.mxu0 0.0
          %555 = vmatprep.subr.mxu0 0.0
          %556 = vmatpush1.msra.mxu0 0.0
          %557 = vmatprep.subr.mxu0 0.0
          %558 = vmatpush1.msra.mxu0 0.0
          %559 = vmatprep.subr.mxu0 0.0
          %560 = vmatpush1.msra.mxu0 0.0
          %561 = vmatprep.subr.mxu0 0.0
          %562 = vmatpush1.msra.mxu0 0.0
          %563 = vmatprep.subr.mxu0 0.0
          %564 = vmatpush1.msra.mxu0 0.0
          %565 = vmatprep.subr.mxu0 0.0
          %566 = vmatpush1.msra.mxu0 0.0
          %567 = vmatprep.subr.mxu0 0.0
          %568 = vmatpush1.msra.mxu0 0.0
          %569 = vmatprep.mubr.f32.mxu0 0.0
          %570 = vmatmul.mubr.f32.gmra.mrb[0].mxu0 %v457
          %v571 = vpop.f32.mrb[0].mxu0
          %v572 = vadd.f32 0.0, %v571
          %v573 = vpop.f32.mrb[0].mxu0
          %574 = vmatprep.mubr.f32.mxu0 0.0
          %575 = vmatmul.mubr.f32.gmra.mrb[0].mxu0 %v458
          %v576 = vpop.f32.mrb[0].mxu0
          %v577 = vadd.f32 0.0, %v576
          %v578 = vpop.f32.mrb[0].mxu0
          %579 = vmatprep.mubr.f32.mxu0 0.0
          %580 = vmatmul.mubr.f32.gmra.mrb[0].mxu0 %v459
          %v581 = vpop.f32.mrb[0].mxu0
          %v582 = vadd.f32 0.0, %v581
          %v583 = vpop.f32.mrb[0].mxu0
          %584 = vmatprep.mubr.f32.mxu0 0.0
          %585 = vmatmul.mubr.f32.gmra.mrb[0].mxu0 %v460
          %v586 = vpop.f32.mrb[0].mxu0
          %v587 = vadd.f32 0.0, %v586
          %v588 = vpop.f32.mrb[0].mxu0
          %589 = vmatprep.mubr.f32.mxu0 0.0
          %590 = vmatmul.mubr.f32.gmra.mrb[0].mxu0 %v461
          %v591 = vpop.f32.mrb[0].mxu0
          %v592 = vadd.f32 0.0, %v591
          %v593 = vpop.f32.mrb[0].mxu0
          %594 = vmatprep.mubr.f32.mxu0 0.0
          %595 = vmatmul.mubr.f32.gmra.mrb[0].mxu0 %v462
          %v596 = vpop.f32.mrb[0].mxu0
          %v597 = vadd.f32 0.0, %v596
          %v598 = vpop.f32.mrb[0].mxu0
          %599 = vmatprep.mubr.f32.mxu0 0.0
          %600 = vmatmul.mubr.f32.gmra.mrb[0].mxu0 %v463
          %v601 = vpop.f32.mrb[0].mxu0
          %v602 = vadd.f32 0.0, %v601
          %v603 = vpop.f32.mrb[0].mxu0
          %604 = vmatprep.mubr.f32.mxu0 0.0
          %605 = vmatmul.mubr.f32.gmra.mrb[0].mxu0 %v464
          %v606 = vpop.f32.mrb[0].mxu0
          %v607 = vadd.f32 0.0, %v606
          %v608 = vpop.f32.mrb[0].mxu0
          %609 = vmatprep.mubr.f32.mxu0 0.0
          %610 = vmatmul.mubr.f32.gmra.mrb[0].mxu0 %v465
          %v611 = vpop.f32.mrb[0].mxu0
          %v612 = vadd.f32 0.0, %v611
          %v613 = vpop.f32.mrb[0].mxu0
          %614 = vmatprep.mubr.f32.mxu0 0.0
          %615 = vmatmul.mubr.f32.gmra.mrb[0].mxu0 %v466
          %v616 = vpop.f32.mrb[0].mxu0
          %v617 = vadd.f32 0.0, %v616
          %v618 = vpop.f32.mrb[0].mxu0
          %619 = vmatprep.mubr.f32.mxu0 0.0
          %620 = vmatmul.mubr.f32.gmra.mrb[0].mxu0 %v467
          %v621 = vpop.f32.mrb[0].mxu0
          %v622 = vadd.f32 0.0, %v621
          %v623 = vpop.f32.mrb[0].mxu0
          %624 = vmatprep.mubr.f32.mxu0 0.0
          %625 = vmatmul.mubr.f32.gmra.mrb[0].mxu0 %v468
          %v626 = vpop.f32.mrb[0].mxu0
          %v627 = vadd.f32 0.0, %v626
          %v628 = vpop.f32.mrb[0].mxu0
          %629 = vmatprep.mubr.f32.mxu0 0.0
          %630 = vmatmul.mubr.f32.gmra.mrb[0].mxu0 %v469
          %v631 = vpop.f32.mrb[0].mxu0
          %v632 = vadd.f32 0.0, %v631
          %v633 = vpop.f32.mrb[0].mxu0
          %634 = vmatprep.mubr.f32.mxu0 0.0
          %635 = vmatmul.mubr.f32.gmra.mrb[0].mxu0 %v470
          %v636 = vpop.f32.mrb[0].mxu0
          %v637 = vadd.f32 0.0, %v636
          %v638 = vpop.f32.mrb[0].mxu0
          %639 = vmatprep.mubr.f32.mxu0 0.0
          %640 = vmatmul.mubr.f32.gmra.mrb[0].mxu0 %v471
          %v641 = vpop.f32.mrb[0].mxu0
          %v642 = vadd.f32 0.0, %v641
          %v643 = vpop.f32.mrb[0].mxu0
          %644 = vmatprep.mubr.f32.mxu0 0.0
          %645 = vmatmul.mubr.f32.gmra.mrb[0].mxu0 %v472
          %v646 = vpop.f32.mrb[0].mxu0
          %v647 = vadd.f32 0.0, %v646
          %v648 = vpop.f32.mrb[0].mxu0
          %649 = vmatprep.mubr.f32.mxu0 0.0
          %650 = vmatmul.mubr.f32.gmra.mrb[0].mxu0 %v473
          %v651 = vpop.f32.mrb[0].mxu0
          %v652 = vadd.f32 0.0, %v651
          %v653 = vpop.f32.mrb[0].mxu0
          %654 = vmatprep.mubr.f32.mxu0 0.0
          %655 = vmatmul.mubr.f32.gmra.mrb[0].mxu0 %v474
          %v656 = vpop.f32.mrb[0].mxu0
          %v657 = vadd.f32 0.0, %v656
          %v658 = vpop.f32.mrb[0].mxu0
          %659 = vmatprep.mubr.f32.mxu0 0.0
          %660 = vmatmul.mubr.f32.gmra.mrb[0].mxu0 %v475
          %v661 = vpop.f32.mrb[0].mxu0
          %v662 = vadd.f32 0.0, %v661
          %v663 = vpop.f32.mrb[0].mxu0
          %664 = vmatprep.mubr.f32.mxu0 0.0
          %665 = vmatmul.mubr.f32.gmra.mrb[0].mxu0 %v476
          %v666 = vpop.f32.mrb[0].mxu0
          %v667 = vadd.f32 0.0, %v666
          %v668 = vpop.f32.mrb[0].mxu0
          %669 = vmatprep.mubr.f32.mxu0 0.0
          %670 = vmatmul.mubr.f32.gmra.mrb[0].mxu0 %v477
          %v671 = vpop.f32.mrb[0].mxu0
          %v672 = vadd.f32 0.0, %v671
          %v673 = vpop.f32.mrb[0].mxu0
          %674 = vmatprep.mubr.f32.mxu0 0.0
          %675 = vmatmul.mubr.f32.gmra.mrb[0].mxu0 %v478
          %v676 = vpop.f32.mrb[0].mxu0
          %v677 = vadd.f32 0.0, %v676
          %v678 = vpop.f32.mrb[0].mxu0
          %679 = vmatprep.mubr.f32.mxu0 0.0
          %680 = vmatmul.mubr.f32.gmra.mrb[0].mxu0 %v479
          %v681 = vpop.f32.mrb[0].mxu0
          %v682 = vadd.f32 0.0, %v681
          %v683 = vpop.f32.mrb[0].mxu0
          %684 = vmatprep.mubr.f32.mxu0 0.0
          %685 = vmatmul.mubr.f32.gmra.mrb[0].mxu0 %v480
          %v686 = vpop.f32.mrb[0].mxu0
          %v687 = vadd.f32 0.0, %v686
          %v688 = vpop.f32.mrb[0].mxu0
          %689 = vmatprep.mubr.f32.mxu0 0.0
          %690 = vmatmul.mubr.f32.gmra.mrb[0].mxu0 %v481
          %v691 = vpop.f32.mrb[0].mxu0
          %v692 = vadd.f32 0.0, %v691
          %v693 = vpop.f32.mrb[0].mxu0
          %694 = vmatprep.mubr.f32.mxu0 0.0
          %695 = vmatmul.mubr.f32.gmra.mrb[0].mxu0 %v482
          %v696 = vpop.f32.mrb[0].mxu0
          %v697 = vadd.f32 0.0, %v696
          %v698 = vpop.f32.mrb[0].mxu0
          %699 = vmatprep.mubr.f32.mxu0 0.0
          %700 = vmatmul.mubr.f32.gmra.mrb[0].mxu0 %v483
          %v701 = vpop.f32.mrb[0].mxu0
          %v702 = vadd.f32 0.0, %v701
          %v703 = vpop.f32.mrb[0].mxu0
          %704 = vmatprep.mubr.f32.mxu0 0.0
          %705 = vmatmul.mubr.f32.gmra.mrb[0].mxu0 %v484
          %v706 = vpop.f32.mrb[0].mxu0
          %v707 = vadd.f32 0.0, %v706
          %v708 = vpop.f32.mrb[0].mxu0
          %709 = vmatprep.mubr.f32.mxu0 0.0
          %710 = vmatmul.mubr.f32.gmra.mrb[0].mxu0 %v485
          %v711 = vpop.f32.mrb[0].mxu0
          %v712 = vadd.f32 0.0, %v711
          %v713 = vpop.f32.mrb[0].mxu0
          %714 = vmatprep.mubr.f32.mxu0 0.0
          %715 = vmatmul.mubr.f32.gmra.mrb[0].mxu0 %v486
          %v716 = vpop.f32.mrb[0].mxu0
          %v717 = vadd.f32 0.0, %v716
          %v718 = vpop.f32.mrb[0].mxu0
          %719 = vmatprep.mubr.f32.mxu0 0.0
          %720 = vmatmul.mubr.f32.gmra.mrb[0].mxu0 %v487
          %v721 = vpop.f32.mrb[0].mxu0
          %v722 = vadd.f32 0.0, %v721
          %v723 = vpop.f32.mrb[0].mxu0
          %724 = vmatprep.mubr.f32.mxu0 0.0
          %725 = vmatmul.mubr.f32.gmra.mrb[0].mxu0 %v488
          %v726 = vpop.f32.mrb[0].mxu0
          %v727 = vadd.f32 0.0, %v726
          %v728 = vpop.f32.mrb[0].mxu0
          %729 = vdwg.mxu0
          %730 = vst [vmem:[%s178] sm:$0xff] %v572
          %731 = vst [vmem:[%s178 + $0x8] sm:$0xff] %v577
          %732 = vst [vmem:[%s178 + $0x10] sm:$0xff] %v582
          %733 = vst [vmem:[%s178 + $0x18] sm:$0xff] %v587
          %734 = vst [vmem:[%s178 + $0x20] sm:$0xff] %v592
          %735 = vst [vmem:[%s178 + $0x28] sm:$0xff] %v597
          %736 = vst [vmem:[%s178 + $0x30] sm:$0xff] %v602
          %737 = vst [vmem:[%s178 + $0x38] sm:$0xff] %v607
          %738 = vst [vmem:[%s178 + $0x40] sm:$0xff] %v612
          %739 = vst [vmem:[%s178 + $0x48] sm:$0xff] %v617
          %740 = vst [vmem:[%s178 + $0x50] sm:$0xff] %v622
          %741 = vst [vmem:[%s178 + $0x58] sm:$0xff] %v627
          %742 = vst [vmem:[%s178 + $0x60] sm:$0xff] %v632
          %743 = vst [vmem:[%s178 + $0x68] sm:$0xff] %v637
          %744 = vst [vmem:[%s178 + $0x70] sm:$0xff] %v642
          %745 = vst [vmem:[%s178 + $0x78] sm:$0xff] %v647
          %746 = vst [vmem:[%s178 + $0x80] sm:$0xff] %v652
          %747 = vst [vmem:[%s178 + $0x88] sm:$0xff] %v657
          %748 = vst [vmem:[%s178 + $0x90] sm:$0xff] %v662
          %749 = vst [vmem:[%s178 + $0x98] sm:$0xff] %v667
          %750 = vst [vmem:[%s178 + $0xa0] sm:$0xff] %v672
          %751 = vst [vmem:[%s178 + $0xa8] sm:$0xff] %v677
          %752 = vst [vmem:[%s178 + $0xb0] sm:$0xff] %v682
          %753 = vst [vmem:[%s178 + $0xb8] sm:$0xff] %v687
          %754 = vst [vmem:[%s178 + $0xc0] sm:$0xff] %v692
          %755 = vst [vmem:[%s178 + $0xc8] sm:$0xff] %v697
          %756 = vst [vmem:[%s178 + $0xd0] sm:$0xff] %v702
          %757 = vst [vmem:[%s178 + $0xd8] sm:$0xff] %v707
          %758 = vst [vmem:[%s178 + $0xe0] sm:$0xff] %v712
          %759 = vst [vmem:[%s178 + $0xe8] sm:$0xff] %v717
          %760 = vst [vmem:[%s178 + $0xf0] sm:$0xff] %v722
          %761 = vst [vmem:[%s178 + $0xf8] sm:$0xff] %v727
        $region36: #{seqsep_forward.1} parent=31 // pred_fallthru
          _
        %p762 = scmp.ne.s32.totalorder %s21, 0
        // Predicated region
        $region37: #{seqsep_forward.1} parent=31 // pred_check
          %p763 = pneg %p762
        $region38: #{seqsep_forward.1} parent=31 // pred_check_branch
          %765 = sbr.rel (%p763) target = $region40
        $region39: #{seqsep_forward.1} parent=31 // pred_region
          %v766 = vld [vmem:[%s2 + $0x40] sm:$0x1]
          %v767 = vlaneseq
          %v768 = vshrl.u32 %v767, 7
          %v769 = vsub.s32 0, %v768
          %v770 = vrot.slane %v766, %v769
          %771 = vst [vmem:[%s178] sm:$0xff] %v770
          %772 = vst [vmem:[%s178 + $0x8] sm:$0xff] %v770
          %773 = vst [vmem:[%s178 + $0x10] sm:$0xff] %v770
          %774 = vst [vmem:[%s178 + $0x18] sm:$0xff] %v770
          %775 = vst [vmem:[%s178 + $0x20] sm:$0xff] %v770
          %776 = vst [vmem:[%s178 + $0x28] sm:$0xff] %v770
          %777 = vst [vmem:[%s178 + $0x30] sm:$0xff] %v770
          %778 = vst [vmem:[%s178 + $0x38] sm:$0xff] %v770
          %779 = vst [vmem:[%s178 + $0x40] sm:$0xff] %v770
          %780 = vst [vmem:[%s178 + $0x48] sm:$0xff] %v770
          %781 = vst [vmem:[%s178 + $0x50] sm:$0xff] %v770
          %782 = vst [vmem:[%s178 + $0x58] sm:$0xff] %v770
          %783 = vst [vmem:[%s178 + $0x60] sm:$0xff] %v770
          %784 = vst [vmem:[%s178 + $0x68] sm:$0xff] %v770
          %785 = vst [vmem:[%s178 + $0x70] sm:$0xff] %v770
          %786 = vst [vmem:[%s178 + $0x78] sm:$0xff] %v770
          %787 = vst [vmem:[%s178 + $0x80] sm:$0xff] %v770
          %788 = vst [vmem:[%s178 + $0x88] sm:$0xff] %v770
          %789 = vst [vmem:[%s178 + $0x90] sm:$0xff] %v770
          %790 = vst [vmem:[%s178 + $0x98] sm:$0xff] %v770
          %791 = vst [vmem:[%s178 + $0xa0] sm:$0xff] %v770
          %792 = vst [vmem:[%s178 + $0xa8] sm:$0xff] %v770
          %793 = vst [vmem:[%s178 + $0xb0] sm:$0xff] %v770
          %794 = vst [vmem:[%s178 + $0xb8] sm:$0xff] %v770
          %795 = vst [vmem:[%s178 + $0xc0] sm:$0xff] %v770
          %796 = vst [vmem:[%s178 + $0xc8] sm:$0xff] %v770
          %797 = vst [vmem:[%s178 + $0xd0] sm:$0xff] %v770
          %798 = vst [vmem:[%s178 + $0xd8] sm:$0xff] %v770
          %799 = vst [vmem:[%s178 + $0xe0] sm:$0xff] %v770
          %800 = vst [vmem:[%s178 + $0xe8] sm:$0xff] %v770
          %801 = vst [vmem:[%s178 + $0xf0] sm:$0xff] %v770
          %802 = vst [vmem:[%s178 + $0xf8] sm:$0xff] %v770
        $region40: #{seqsep_forward.1} parent=31 // pred_fallthru
          _
        %s803 = sand.u32 %s107, 1
        %s804 = scalar_lea.sflag [#allocation3], %s803
        %s805 = sand.u32 %s107, 1
        %s806 = smul.addr %s805, 256
        %s807 = scalar_lea.vmem [#allocation2], %s806
        // Predicated region
        $region41: #{seqsep_forward.1} parent=31 // pred_check
          %p808 = pneg %p117
        $region42: #{seqsep_forward.1} parent=31 // pred_check_branch
          %810 = sbr.rel (%p808) target = $region44
        $region43: #{seqsep_forward.1} parent=31 // pred_region
          %s811 = smul.u32 16, %s22
          %s813 = ssub.s32 4096, 4096
          %814 = vsyncadd %s804, %s813
          %s815 = smul.addr %s811, 2
          %s816 = smul.addr %s21, 32
          %s817 = sadd.s32 %s815, %s816
          %s818 = smul.addr %s817, 128
          %s819 = scalar_lea.hbm %s3, %s818
          %s820 = sshll.u32 %s807, 4
          %s821 = int_to_ptr.vmem [resolvable:$true] %s820
          %826 = dma.vmem_to_hbm [thread:$0]  %s821, 4096, %s819, %s804, 128, 128, 8
        $region44: #{seqsep_forward.1} parent=31 // pred_fallthru
          _
      $region32: #{seqsep_forward.1} parent=5 // pred_fallthru
        _
      %p827 = scmp.le.s32.totalorder 2, %s12
      // Predicated region
      $region45: #{seqsep_forward.1} parent=5 // pred_check
        %p828 = pneg %p827
      $region46: #{seqsep_forward.1} parent=5 // pred_check_branch
        %830 = sbr.rel (%p828) target = $region48
      $region47: #{seqsep_forward.1} parent=5 // pred_region
        %s831 = ssub.s32 %s12, 2
        // Predicated region
        $region49: #{seqsep_forward.1} parent=47 // pred_check
          %p832 = pneg %p123
        $region50: #{seqsep_forward.1} parent=47 // pred_check_branch
          %834 = sbr.rel (%p832) target = $region52
        $region51: #{seqsep_forward.1} parent=47 // pred_region
          %s835 = sand.u32 %s108, 1
          %s836 = scalar_lea.sflag [#allocation3], %s835
          %s837 = sand.u32 %s108, 1
          %s838 = smul.addr %s837, 256
          %s839 = scalar_lea.vmem [#allocation2], %s838
          %840 = dma.done %s836, 4096
        $region52: #{seqsep_forward.1} parent=47 // pred_fallthru
          _
      $region48: #{seqsep_forward.1} parent=5 // pred_fallthru
        _
    $region6: #{seqsep_forward.1} parent=1 // loop_footer
      %s16 = sadd.s32 1, %s12
    $region7: #{seqsep_forward.1} parent=1 // loop_footer_branch
      %11 = sbr.rel target = $region3
    $region8: #{seqsep_forward.1} parent=1 // loop_exit
      _
    %841 = vsyncpa [#allocation3], 1
    %s842 = scalar_lea.sflag [#allocation3], 1
    %843 = vsyncpa %s842, 1

</llo_original>
